<compile_context>
chip_gen: v7x
topology: tpu7x:2x2x1
jax: 0.10.0
libtpu: 0.0.40
codegen_flags: <defaults>
</compile_context>

<pallas_src>
import functools

import jax
import jax.numpy as jnp
from jax import lax
from jax.experimental import pallas as pl
from jax.experimental.pallas import tpu as pltpu


VMEM_LIMIT_BYTES = 48 * 1024 * 1024     # comfortably under v7x's 64 MiB physical
ATTN_VMEM_BUDGET = 14 * 1024 * 1024     # target working set for tile selection


# ----------------------------------------------------------------------------
# Tiling helpers
# ----------------------------------------------------------------------------
def _round_up(x, m):
    return ((x + m - 1) // m) * m


def _divisor_tile(n, target, quantum=8):
    """Largest divisor of n that is <= target, preferring multiples of
    `quantum` (8 sublanes for f32, 16 for bf16).  Falls back to the full
    extent, which is always a legal block shape."""
    if n <= target:
        return n
    best = None
    for t in range(min(target, n), 0, -1):
        if n % t == 0:
            if t % quantum == 0:
                return t
            if best is None:
                best = t
    if best is not None and best >= quantum:
        return best
    return n   # full extent fallback (ragged sizes; demo shapes are tiny)


def _attn_vmem_bytes(tq, tk, hd, cout, itemsize):
    lanes_out = _round_up(max(cout, 1), 128)
    # inputs/outputs are double-buffered by the BlockSpec pipeline
    io = 2 * itemsize * (tq * hd + 2 * tk * hd + tq * lanes_out + hd * lanes_out)
    # f32 scratch: acc (tq, H*dh) + m/l (lane-padded to 128)
    scratch = 4 * (tq * hd + 2 * tq * 128)
    return io + scratch


def _attn_tiles(nq, nk, hd, cout, itemsize, budget_bytes):
    quantum = 16 if itemsize <= 2 else 8
    tq = _divisor_tile(nq, 512, quantum)
    tk = nk   # prefer kv-resident K/V: no per-q-tile HBM re-streaming
    while _attn_vmem_bytes(tq, tk, hd, cout, itemsize) > budget_bytes:
        if tk >= 1024:
            new_tk = _divisor_tile(nk, tk // 2, quantum)
            if new_tk < tk:
                tk = new_tk
                continue
        if tq >= 256:
            new_tq = _divisor_tile(nq, tq // 2, quantum)
            if new_tq < tq:
                tq = new_tq
                continue
        if tk > 256:
            new_tk = _divisor_tile(nk, tk // 2, quantum)
            if new_tk < tk:
                tk = new_tk
                continue
        break
    return tq, tk


# ----------------------------------------------------------------------------
# Kernel 1: fused multi-projection
#   y_i[b, n, :] = x[b, n, :] @ W_i          (W_i: (Cin, heads*dim_head))
#   One activation-tile read feeds all projections; weight index maps are
#   constant so the weights stay VMEM-resident across the whole grid.
# ----------------------------------------------------------------------------
def _fused_proj_kernel(x_ref, *refs):
    n = len(refs) // 2
    x = x_ref[0]                                     # (t, Cin)
    for i in range(n):
        w_ref, o_ref = refs[i], refs[n + i]
        o_ref[0] = jnp.dot(x, w_ref[...],
                           preferred_element_type=jnp.float32).astype(o_ref.dtype)


def fused_projections(x, weights, *, tm=512):
    """x: (B, L, Cin); weights: tuple of (Cin, Dout_i) -> tuple of (B, L, Dout_i)."""
    B, L, Cin = x.shape
    itemsize = jnp.dtype(x.dtype).itemsize
    quantum = 16 if itemsize <= 2 else 8
    t = _divisor_tile(L, tm, quantum)
    grid = (B, L // t)

    in_specs = [pl.BlockSpec((1, t, Cin), lambda b, m: (b, m, 0))]
    out_specs = []
    out_shapes = []
    for w in weights:
        dout = w.shape[1]
        in_specs.append(pl.BlockSpec(w.shape, lambda b, m: (0, 0)))
        out_specs.append(pl.BlockSpec((1, t, dout), lambda b, m: (b, m, 0)))
        out_shapes.append(jax.ShapeDtypeStruct((B, L, dout), x.dtype))

    outs = pl.pallas_call(
        _fused_proj_kernel,
        out_shape=tuple(out_shapes),
        grid_spec=pltpu.PrefetchScalarGridSpec(
            num_scalar_prefetch=0,
            grid=grid,
            in_specs=in_specs,
            out_specs=tuple(out_specs)),
        compiler_params=pltpu.CompilerParams(
            dimension_semantics=("parallel", "parallel"),
            vmem_limit_bytes=VMEM_LIMIT_BYTES),
    )(x, *weights)
    return tuple(outs) if isinstance(outs, (tuple, list)) else (outs,)


# ----------------------------------------------------------------------------
# Kernel 2: flash attention (all heads per step, online softmax over kv axis)
#           with the to_out projection + bias fused into the finalize.
# ----------------------------------------------------------------------------
def _attn_out_kernel(q_ref, k_ref, v_ref, wo_ref, bo_ref, o_ref,
                     m_sc, l_sc, acc_sc, *, scale, heads, dim_head):
    # NOTE: the kv grid axis MUST stay innermost ("arbitrary") -- the m/l/acc
    # scratch init/finalize below relies on it.
    ki = pl.program_id(2)

    @pl.when(ki == 0)
    def _init():
        m_sc[...] = jnp.full_like(m_sc, -jnp.inf)
        l_sc[...] = jnp.zeros_like(l_sc)
        acc_sc[...] = jnp.zeros_like(acc_sc)

    q_all = q_ref[0]                                  # (tq, H*dh) bf16, lane-dense
    k_all = k_ref[0]                                  # (tk, H*dh)
    v_all = v_ref[0]                                  # (tk, H*dh)

    for h in range(heads):                            # static unroll, small H
        sl = slice(h * dim_head, (h + 1) * dim_head)
        q = q_all[:, sl] * scale                      # scale on (tq, dh), not scores
        k = k_all[:, sl]
        v = v_all[:, sl]
        # contract last dims directly -> no explicit k.T (no XLU transpose)
        s = lax.dot_general(q, k, (((1,), (1,)), ((), ())),
                            preferred_element_type=jnp.float32)       # (tq, tk) f32

        m_prev = m_sc[:, h:h + 1]                     # (tq, 1)
        m_new = jnp.maximum(m_prev, jnp.max(s, axis=-1, keepdims=True))
        alpha = jnp.exp(m_prev - m_new)
        p = jnp.exp(s - m_new)
        l_sc[:, h:h + 1] = alpha * l_sc[:, h:h + 1] + jnp.sum(p, axis=-1,
                                                              keepdims=True)
        acc_sc[:, sl] = alpha * acc_sc[:, sl] + jnp.dot(
            p.astype(v.dtype), v, preferred_element_type=jnp.float32)
        m_sc[:, h:h + 1] = m_new

    @pl.when(ki == pl.num_programs(2) - 1)
    def _finalize():
        # deferred per-head normalization (EUP reciprocal; use approx=False for
        # bit-stricter parity), then the fused to_out matmul over K = H*dh.
        for h in range(heads):
            sl = slice(h * dim_head, (h + 1) * dim_head)
            inv = pl.reciprocal(l_sc[:, h:h + 1], approx=True)
            acc_sc[:, sl] = acc_sc[:, sl] * inv
        att = acc_sc[...].astype(q_ref.dtype)                         # (tq, H*dh)
        out = jnp.dot(att, wo_ref[...], preferred_element_type=jnp.float32)
        o_ref[0] = (out + bo_ref[...].astype(jnp.float32)).astype(o_ref.dtype)


def flash_attention_out(q, k, v, wo, bo, scale, *, heads, dim_head,
                        out_dtype=None, vmem_budget=ATTN_VMEM_BUDGET):
    """q: (B, Nq, H*dh), k/v: (B, Nk, H*dh), wo: (H*dh, Cout), bo: (Cout,)
    -> (B, Nq, Cout) = to_out(softmax(q k^T * scale) v)."""
    B, Nq, hd = q.shape
    Nk = k.shape[1]
    Cout = wo.shape[1]
    assert hd == heads * dim_head
    out_dtype = q.dtype if out_dtype is None else out_dtype

    itemsize = jnp.dtype(q.dtype).itemsize
    tq, tk = _attn_tiles(Nq, Nk, hd, Cout, itemsize, vmem_budget)
    grid = (B, Nq // tq, Nk // tk)

    kern = functools.partial(_attn_out_kernel, scale=scale, heads=heads,
                             dim_head=dim_head)
    bo2 = bo.reshape(1, Cout).astype(jnp.float32)

    return pl.pallas_call(
        kern,
        out_shape=jax.ShapeDtypeStruct((B, Nq, Cout), out_dtype),
        grid_spec=pltpu.PrefetchScalarGridSpec(
            num_scalar_prefetch=0,
            grid=grid,
            in_specs=[
                pl.BlockSpec((1, tq, hd), lambda b, qi, ki: (b, qi, 0)),
                pl.BlockSpec((1, tk, hd), lambda b, qi, ki: (b, ki, 0)),
                pl.BlockSpec((1, tk, hd), lambda b, qi, ki: (b, ki, 0)),
                pl.BlockSpec((hd, Cout), lambda b, qi, ki: (0, 0)),   # wo resident
                pl.BlockSpec((1, Cout), lambda b, qi, ki: (0, 0)),    # bias
            ],
            out_specs=pl.BlockSpec((1, tq, Cout), lambda b, qi, ki: (b, qi, 0)),
            scratch_shapes=[
                pltpu.VMEM((tq, heads), jnp.float32),    # running max per head
                pltpu.VMEM((tq, heads), jnp.float32),    # running sum per head
                pltpu.VMEM((tq, hd), jnp.float32),       # lane-dense accumulator
            ],
        ),
        compiler_params=pltpu.CompilerParams(
            dimension_semantics=("parallel", "parallel", "arbitrary"),
            vmem_limit_bytes=VMEM_LIMIT_BYTES),
    )(q, k, v, wo, bo2)


# ----------------------------------------------------------------------------
# Module-level wrapper (matches CrossAttention.forward)
# ----------------------------------------------------------------------------
def init_cross_attention_params(key, query_dim, context_dim=None, heads=8,
                                dim_head=64):
    context_dim = query_dim if context_dim is None else context_dim
    inner = heads * dim_head
    k1, k2, k3, k4 = jax.random.split(key, 4)
    std = 0.02
    return {
        # lane-dense layouts: column index h*dim_head + d == PyTorch's '(h d)'
        "wq": jax.random.normal(k1, (query_dim, inner), jnp.float32) * std,
        "wk": jax.random.normal(k2, (context_dim, inner), jnp.float32) * std,
        "wv": jax.random.normal(k3, (context_dim, inner), jnp.float32) * std,
        "wo": jax.random.normal(k4, (inner, query_dim), jnp.float32) * std,
        "bo": jnp.zeros((query_dim,), jnp.float32),
    }


def cross_attention_forward(params, x, context=None, mask=None, *, heads,
                            dim_head, compute_dtype=jnp.bfloat16):
    """x: (B, N, query_dim), context: (B, M, context_dim) or None."""
    # TODO(synk): `mask` is accepted but never applied, matching the upstream
    # optimized-SD CrossAttention.forward (no masking path implemented).
    del mask
    scale = dim_head ** (-0.5)
    cd = compute_dtype

    wq = params["wq"].astype(cd)
    wk = params["wk"].astype(cd)
    wv = params["wv"].astype(cd)
    wo = params["wo"].astype(cd)
    bo = params["bo"]

    x_c = x.astype(cd)
    if context is None:
        # self-attention: one fused QKV projection call (x tile read once)
        q, k, v = fused_projections(x_c, (wq, wk, wv))
    else:
        ctx_c = context.astype(cd)
        (q,) = fused_projections(x_c, (wq,))
        k, v = fused_projections(ctx_c, (wk, wv))          # fused K/V on context

    # flash attention + fused to_out projection (+ bias); Dropout(0.0) = identity
    return flash_attention_out(q, k, v, wo, bo, scale, heads=heads,
                               dim_head=dim_head, out_dtype=x.dtype)


# ----------------------------------------------------------------------------
# Plain-JAX reference for correctness check
# ----------------------------------------------------------------------------
def cross_attention_ref(params, x, context=None, *, heads, dim_head):
    ctx = x if context is None else context
    f32 = jnp.float32
    x32, c32 = x.astype(f32), ctx.astype(f32)
    wq, wk, wv, wo = (params[n].astype(f32) for n in ("wq", "wk", "wv", "wo"))
    bo = params["bo"].astype(f32)
    B, N, _ = x.shape
    M = ctx.shape[1]
    q = (x32 @ wq).reshape(B, N, heads, dim_head)
    k = (c32 @ wk).reshape(B, M, heads, dim_head)
    v = (c32 @ wv).reshape(B, M, heads, dim_head)
    s = jnp.einsum("bnhd,bmhd->bhnm", q, k) * (dim_head ** (-0.5))
    p = jax.nn.softmax(s, axis=-1)
    o = jnp.einsum("bhnm,bmhd->bnhd", p, v).reshape(B, N, heads * dim_head)
    return o @ wo + bo


if __name__ == "__main__":
    B, N, query_dim = 2, 16, 32
    heads, dim_head = 4, 64
    M, context_dim = 24, 48

    key = jax.random.PRNGKey(0)
    kx, kc, kp1, kp2 = jax.random.split(key, 4)
    x = jax.random.normal(kx, (B, N, query_dim), jnp.float32)

    # self-attention path (context=None)
    params = init_cross_attention_params(kp1, query_dim, None, heads, dim_head)
    out = cross_attention_forward(params, x, None, heads=heads, dim_head=dim_head)
    out = jax.block_until_ready(out)
    ref = cross_attention_ref(params, x, None, heads=heads, dim_head=dim_head)
    assert out.shape == (B, N, query_dim)
    assert jnp.allclose(out.astype(jnp.float32), ref, atol=2e-2, rtol=2e-2), \
        "self-attn mismatch vs reference"

    # cross-attention path (explicit context)
    ctx = jax.random.normal(kc, (B, M, context_dim), jnp.float32)
    params_x = init_cross_attention_params(kp2, query_dim, context_dim, heads,
                                           dim_head)
    out_x = cross_attention_forward(params_x, x, ctx, heads=heads,
                                    dim_head=dim_head)
    out_x = jax.block_until_ready(out_x)
    ref_x = cross_attention_ref(params_x, x, ctx, heads=heads, dim_head=dim_head)
    assert out_x.shape == (B, N, query_dim)
    assert jnp.allclose(out_x.astype(jnp.float32), ref_x, atol=2e-2, rtol=2e-2), \
        "cross-attn mismatch vs reference"

    print("KERNEL_OK")
</pallas_src>

<mosaic_0001>
module attributes {stable_mosaic.version = 11 : i64} {
  func.func @_fused_proj_kernel(%arg0: i32, %arg1: i32, %arg2: memref<1x16x32xbf16, #tpu.memory_space<vmem>>, %arg3: memref<32x256xbf16, #tpu.memory_space<vmem>>, %arg4: memref<32x256xbf16, #tpu.memory_space<vmem>>, %arg5: memref<32x256xbf16, #tpu.memory_space<vmem>>, %arg6: memref<1x16x256xbf16, #tpu.memory_space<vmem>>, %arg7: memref<1x16x256xbf16, #tpu.memory_space<vmem>>, %arg8: memref<1x16x256xbf16, #tpu.memory_space<vmem>>) attributes {dimension_semantics = [#tpu.dimension_semantics<parallel>, #tpu.dimension_semantics<parallel>], iteration_bounds = array<i64: 2, 1>, scalar_prefetch = 0 : i64, scratch_operands = 0 : i64, tpu.core_type = #tpu.core_type<tc>, window_params = [{transform_indices = @transform_0, window_bounds = array<i64: 1, 16, 32>}, {pipeline_mode = #tpu.pipeline_mode<synchronous>, transform_indices = @transform_1, window_bounds = array<i64: 32, 256>}, {pipeline_mode = #tpu.pipeline_mode<synchronous>, transform_indices = @transform_2, window_bounds = array<i64: 32, 256>}, {pipeline_mode = #tpu.pipeline_mode<synchronous>, transform_indices = @transform_3, window_bounds = array<i64: 32, 256>}, {transform_indices = @transform_4, window_bounds = array<i64: 1, 16, 256>}, {transform_indices = @transform_5, window_bounds = array<i64: 1, 16, 256>}, {transform_indices = @transform_6, window_bounds = array<i64: 1, 16, 256>}]} {
    %c0 = arith.constant 0 : index
    %c0_0 = arith.constant 0 : index
    %c0_1 = arith.constant 0 : index
    %0 = vector.load %arg2[%c0, %c0_0, %c0_1] : memref<1x16x32xbf16, #tpu.memory_space<vmem>>, vector<1x16x32xbf16>
    %1 = vector.shape_cast %0 : vector<1x16x32xbf16> to vector<16x32xbf16>
    %c0_2 = arith.constant 0 : index
    %c0_3 = arith.constant 0 : index
    %2 = vector.load %arg3[%c0_2, %c0_3] : memref<32x256xbf16, #tpu.memory_space<vmem>>, vector<32x256xbf16>
    %cst = arith.constant dense<0.000000e+00> : vector<16x256xf32>
    %3 = tpu.matmul %1, %2, %cst {dimension_numbers = #tpu.dot_dimension_numbers<[1], [0], [0], [1], [0, 0, 1, 1], [], []>} : vector<16x32xbf16>, vector<32x256xbf16>, vector<16x256xf32> -> vector<16x256xf32>
    %4 = arith.truncf %3 : vector<16x256xf32> to vector<16x256xbf16>
    %c0_4 = arith.constant 0 : index
    %c0_5 = arith.constant 0 : index
    %c0_6 = arith.constant 0 : index
    %5 = vector.load %arg6[%c0_4, %c0_5, %c0_6] : memref<1x16x256xbf16, #tpu.memory_space<vmem>>, vector<1x16x256xbf16>
    %6 = vector.shape_cast %5 : vector<1x16x256xbf16> to vector<16x256xbf16>
    %7 = vector.shape_cast %4 : vector<16x256xbf16> to vector<1x16x256xbf16>
    tpu.vector_store %arg6[%c0_4, %c0_5, %c0_6], %7 {strides = array<i32>} : memref<1x16x256xbf16, #tpu.memory_space<vmem>>, vector<1x16x256xbf16>,
    %c0_7 = arith.constant 0 : index
    %c0_8 = arith.constant 0 : index
    %8 = vector.load %arg4[%c0_7, %c0_8] : memref<32x256xbf16, #tpu.memory_space<vmem>>, vector<32x256xbf16>
    %cst_9 = arith.constant dense<0.000000e+00> : vector<16x256xf32>
    %9 = tpu.matmul %1, %8, %cst_9 {dimension_numbers = #tpu.dot_dimension_numbers<[1], [0], [0], [1], [0, 0, 1, 1], [], []>} : vector<16x32xbf16>, vector<32x256xbf16>, vector<16x256xf32> -> vector<16x256xf32>
    %10 = arith.truncf %9 : vector<16x256xf32> to vector<16x256xbf16>
    %c0_10 = arith.constant 0 : index
    %c0_11 = arith.constant 0 : index
    %c0_12 = arith.constant 0 : index
    %11 = vector.load %arg7[%c0_10, %c0_11, %c0_12] : memref<1x16x256xbf16, #tpu.memory_space<vmem>>, vector<1x16x256xbf16>
    %12 = vector.shape_cast %11 : vector<1x16x256xbf16> to vector<16x256xbf16>
    %13 = vector.shape_cast %10 : vector<16x256xbf16> to vector<1x16x256xbf16>
    tpu.vector_store %arg7[%c0_10, %c0_11, %c0_12], %13 {strides = array<i32>} : memref<1x16x256xbf16, #tpu.memory_space<vmem>>, vector<1x16x256xbf16>,
    %c0_13 = arith.constant 0 : index
    %c0_14 = arith.constant 0 : index
    %14 = vector.load %arg5[%c0_13, %c0_14] : memref<32x256xbf16, #tpu.memory_space<vmem>>, vector<32x256xbf16>
    %cst_15 = arith.constant dense<0.000000e+00> : vector<16x256xf32>
    %15 = tpu.matmul %1, %14, %cst_15 {dimension_numbers = #tpu.dot_dimension_numbers<[1], [0], [0], [1], [0, 0, 1, 1], [], []>} : vector<16x32xbf16>, vector<32x256xbf16>, vector<16x256xf32> -> vector<16x256xf32>
    %16 = arith.truncf %15 : vector<16x256xf32> to vector<16x256xbf16>
    %c0_16 = arith.constant 0 : index
    %c0_17 = arith.constant 0 : index
    %c0_18 = arith.constant 0 : index
    %17 = vector.load %arg8[%c0_16, %c0_17, %c0_18] : memref<1x16x256xbf16, #tpu.memory_space<vmem>>, vector<1x16x256xbf16>
    %18 = vector.shape_cast %17 : vector<1x16x256xbf16> to vector<16x256xbf16>
    %19 = vector.shape_cast %16 : vector<16x256xbf16> to vector<1x16x256xbf16>
    tpu.vector_store %arg8[%c0_16, %c0_17, %c0_18], %19 {strides = array<i32>} : memref<1x16x256xbf16, #tpu.memory_space<vmem>>, vector<1x16x256xbf16>,
    return
  }
  func.func @transform_0(%arg0: i32, %arg1: i32) -> (i32, i32, i32) {
    %c0_i32 = arith.constant 0 : i32
    %c0_i32_0 = arith.constant 0 : i32
    return %arg0, %arg1, %c0_i32 : i32, i32, i32
  }
  func.func @transform_1(%arg0: i32, %arg1: i32) -> (i32, i32) {
    %c0_i32 = arith.constant 0 : i32
    %c0_i32_0 = arith.constant 0 : i32
    %c0_i32_1 = arith.constant 0 : i32
    return %c0_i32, %c0_i32_0 : i32, i32
  }
  func.func @transform_2(%arg0: i32, %arg1: i32) -> (i32, i32) {
    %c0_i32 = arith.constant 0 : i32
    %c0_i32_0 = arith.constant 0 : i32
    %c0_i32_1 = arith.constant 0 : i32
    return %c0_i32, %c0_i32_0 : i32, i32
  }
  func.func @transform_3(%arg0: i32, %arg1: i32) -> (i32, i32) {
    %c0_i32 = arith.constant 0 : i32
    %c0_i32_0 = arith.constant 0 : i32
    %c0_i32_1 = arith.constant 0 : i32
    return %c0_i32, %c0_i32_0 : i32, i32
  }
  func.func @transform_4(%arg0: i32, %arg1: i32) -> (i32, i32, i32) {
    %c0_i32 = arith.constant 0 : i32
    %c0_i32_0 = arith.constant 0 : i32
    return %arg0, %arg1, %c0_i32 : i32, i32, i32
  }
  func.func @transform_5(%arg0: i32, %arg1: i32) -> (i32, i32, i32) {
    %c0_i32 = arith.constant 0 : i32
    %c0_i32_0 = arith.constant 0 : i32
    return %arg0, %arg1, %c0_i32 : i32, i32, i32
  }
  func.func @transform_6(%arg0: i32, %arg1: i32) -> (i32, i32, i32) {
    %c0_i32 = arith.constant 0 : i32
    %c0_i32_0 = arith.constant 0 : i32
    return %arg0, %arg1, %c0_i32 : i32, i32, i32
  }
}

</mosaic_0001>

<llo_original>
// kernel: tpu_custom_call.1
$region0: #{tpu_custom_call.1}
  #allocation0 [shape = 'u32[]', space=smem, size = 0x4, offset = 0x4, fixed_abs, tag = 'smem constant byte address 0x4 - core index']
  #allocation1 [shape = 'u32[144,128]{1,0:T(1,128)}', space=vmem, size = 0x12000, scoped, tag = 'internal scratch']
  %s0 = inlined_call_operand.hbm [shape: bf16[2,16,32], index: 0, kind: input, shape index: {}]
  %s1 = inlined_call_operand.hbm [shape: bf16[32,256], index: 1, kind: input, shape index: {}]
  %s2 = inlined_call_operand.hbm [shape: bf16[32,256], index: 2, kind: input, shape index: {}]
  %s3 = inlined_call_operand.hbm [shape: bf16[32,256], index: 3, kind: input, shape index: {}]
  %s4 = inlined_call_operand.hbm [shape: bf16[2,16,256], index: 4, kind: output, shape index: {0}]
  %s5 = inlined_call_operand.hbm [shape: bf16[2,16,256], index: 5, kind: output, shape index: {1}]
  %s6 = inlined_call_operand.hbm [shape: bf16[2,16,256], index: 6, kind: output, shape index: {2}]
  %7 = xla_tuple %s4, %s5, %s6
  %s8 = sld [smem:[#allocation0]]
  $region81: #{tpu_custom_call.1} parent=0
    _
  %s10 = ssub.s32 1, %s8
  %s11 = scalar_select 0, %s10, %s8
  $region1: #{tpu_custom_call.1} parent=0
    #allocation2 [shape = 'u8[8192]{0}', space=vmem, size = 0x2000, scoped, tag = 'input window, operand 0']
    #allocation3 [shape = 's32[2]{0}', space=sflag, size = 0x8, scoped, tag = 'scoped memory for tpu_custom_call.1']
    #allocation4 [shape = 's32[2]{0}', space=sflag, size = 0x8, scoped, tag = 'scoped memory for tpu_custom_call.1']
    #allocation5 [shape = 'u8[16384]{0}', space=vmem, size = 0x4000, scoped, tag = 'input window, operand 1, single buffered']
    #allocation6 [shape = 's32[1]{0}', space=sflag, size = 0x4, scoped, tag = 'scoped memory for tpu_custom_call.1']
    #allocation7 [shape = 'u8[16384]{0}', space=vmem, size = 0x4000, scoped, tag = 'input window, operand 2, single buffered']
    #allocation8 [shape = 'u8[16384]{0}', space=vmem, size = 0x4000, scoped, tag = 'input window, operand 3, single buffered']
    #allocation9 [shape = 's32[1]{0}', space=sflag, size = 0x4, scoped, tag = 'scoped memory for tpu_custom_call.1']
    #allocation10 [shape = 'u8[16384]{0}', space=vmem, size = 0x4000, scoped, tag = 'output window, operand 0']
    #allocation11 [shape = 'u8[16384]{0}', space=vmem, size = 0x4000, scoped, tag = 'output window, operand 1']
    #allocation12 [shape = 's32[2]{0}', space=sflag, size = 0x8, scoped, tag = 'scoped memory for tpu_custom_call.1']
    #allocation13 [shape = 'u8[16384]{0}', space=vmem, size = 0x4000, scoped, tag = 'output window, operand 2']
    %12 = vsyncpa [#allocation3], 0
    %s13 = scalar_lea.sflag [#allocation3], 1
    %14 = vsyncpa %s13, 0
    %15 = vsyncpa [#allocation6], 0
    %16 = vsyncpa [#allocation9], 0
    %17 = vsyncpa [#allocation4], 0
    %s18 = scalar_lea.sflag [#allocation4], 1
    %19 = vsyncpa %s18, 0
    %20 = vsyncpa [#allocation12], 0
    %s21 = scalar_lea.sflag [#allocation12], 1
    %22 = vsyncpa %s21, 0
    loop: start=0, step=1, limit=4
    $region2: #{tpu_custom_call.1} parent=1 // loop_pre_header
      _
    $region3: #{tpu_custom_call.1} parent=1 // loop_header
      %s24 = sphi 0, %s28
      %p25 = scmp.ge.s32.totalorder %s24, 4
      %s31 = sphi 0, %s43
      %s32 = sphi 0, %s39
      %s33 = sphi 0, %s31
      %s34 = sphi 0, %s32
      %s35 = sphi 0, %s33
      %s36 = sphi 0, %s34
      %s48 = sphi 0, %s50
      %s51 = sphi 0, %s48
      %s52 = sphi 0, %s51
      %s68 = sphi 0, %s52
      %s72 = sphi 0, %s72
      %s74 = sphi 0, %s72
      %s75 = sphi 0, %s74
      %s89 = sphi 0, %s75
      %s93 = sphi 0, %s93
      %s95 = sphi 0, %s93
      %s96 = sphi 0, %s95
      %s110 = sphi 0, %s96
      %s114 = sphi 0, %s114
      %s116 = sphi 0, %s114
      %s117 = sphi 0, %s116
      %s131 = sphi 0, %s117
      %s139 = sphi 0, %s141
      %s142 = sphi 0, %s139
      %s143 = sphi 0, %s142
      %s159 = sphi 0, %s143
      %s167 = sphi 0, %s169
      %s170 = sphi 0, %s167
      %s171 = sphi 0, %s170
      %s187 = sphi 0, %s171
      %s195 = sphi 0, %s197
      %s198 = sphi 0, %s195
      %s199 = sphi 0, %s198
      %s215 = sphi 0, %s199
    $region4: #{tpu_custom_call.1} parent=1 // loop_header_branch
      %27 = sbr.rel (%p25) target = $region8
    $region5: #{tpu_custom_call.1} parent=1 // loop_body
      %s29 = ssub.s32 %s24, 1
      %s30 = ssub.s32 %s24, 2
      %s37 = sadd.s32 1, %s32
      %p38 = scmp.ge.s32.totalorder %s37, 1
      %s39 = scalar_select %p38, 0, %s37
      %s40 = sadd.s32 1, %s31
      %s41 = scalar_select %p38, %s40, %s31
      %p42 = scmp.ge.s32.totalorder %s41, 2
      %s43 = scalar_select %p42, 0, %s41
      %s44 = ssub.s32 %s31, %s43
      %s45 = ssub.s32 %s32, %s39
      %s46 = sor.u32 %s44, %s45
      %p47 = scmp.eq.s32.totalorder %s46, 0
      %s49 = sadd.s32 %s48, 1
      %s50 = scalar_select %p47, %s48, %s49
      %p53 = pneg %p47
      %p54 = scmp.eq.s32.totalorder %s24, 1
      %p55 = por %p53, %p54
      %p56 = scmp.ne.s32.totalorder %s48, %s51
      %p57 = scmp.eq.s32.totalorder %s24, 0
      %p58 = por %p56, %p57
      %p59 = scmp.ne.s32.totalorder %s48, %s51
      %p60 = scmp.eq.s32.totalorder %s29, 1
      %p61 = por %p59, %p60
      %p62 = scmp.ne.s32.totalorder %s51, %s52
      %p63 = scmp.eq.s32.totalorder %s29, 0
      %p64 = por %p62, %p63
      %p65 = scmp.ne.s32.totalorder %s51, %s52
      %p66 = scmp.eq.s32.totalorder %s30, 1
      %p67 = por %p65, %p66
      %p69 = scmp.ne.s32.totalorder %s52, %s68
      %p70 = scmp.eq.s32.totalorder %s30, 0
      %p71 = por %p69, %p70
      %s73 = sadd.s32 %s72, 1
      %p76 = scmp.eq.s32.totalorder %s24, 1
      %p77 = scmp.ne.s32.totalorder %s72, %s74
      %p78 = scmp.eq.s32.totalorder %s24, 0
      %p79 = por %p77, %p78
      %p80 = scmp.ne.s32.totalorder %s72, %s74
      %p81 = scmp.eq.s32.totalorder %s29, 1
      %p82 = por %p80, %p81
      %p83 = scmp.ne.s32.totalorder %s74, %s75
      %p84 = scmp.eq.s32.totalorder %s29, 0
      %p85 = por %p83, %p84
      %p86 = scmp.ne.s32.totalorder %s74, %s75
      %p87 = scmp.eq.s32.totalorder %s30, 1
      %p88 = por %p86, %p87
      %p90 = scmp.ne.s32.totalorder %s75, %s89
      %p91 = scmp.eq.s32.totalorder %s30, 0
      %p92 = por %p90, %p91
      %s94 = sadd.s32 %s93, 1
      %p97 = scmp.eq.s32.totalorder %s24, 1
      %p98 = scmp.ne.s32.totalorder %s93, %s95
      %p99 = scmp.eq.s32.totalorder %s24, 0
      %p100 = por %p98, %p99
      %p101 = scmp.ne.s32.totalorder %s93, %s95
      %p102 = scmp.eq.s32.totalorder %s29, 1
      %p103 = por %p101, %p102
      %p104 = scmp.ne.s32.totalorder %s95, %s96
      %p105 = scmp.eq.s32.totalorder %s29, 0
      %p106 = por %p104, %p105
      %p107 = scmp.ne.s32.totalorder %s95, %s96
      %p108 = scmp.eq.s32.totalorder %s30, 1
      %p109 = por %p107, %p108
      %p111 = scmp.ne.s32.totalorder %s96, %s110
      %p112 = scmp.eq.s32.totalorder %s30, 0
      %p113 = por %p111, %p112
      %s115 = sadd.s32 %s114, 1
      %p118 = scmp.eq.s32.totalorder %s24, 1
      %p119 = scmp.ne.s32.totalorder %s114, %s116
      %p120 = scmp.eq.s32.totalorder %s24, 0
      %p121 = por %p119, %p120
      %p122 = scmp.ne.s32.totalorder %s114, %s116
      %p123 = scmp.eq.s32.totalorder %s29, 1
      %p124 = por %p122, %p123
      %p125 = scmp.ne.s32.totalorder %s116, %s117
      %p126 = scmp.eq.s32.totalorder %s29, 0
      %p127 = por %p125, %p126
      %p128 = scmp.ne.s32.totalorder %s116, %s117
      %p129 = scmp.eq.s32.totalorder %s30, 1
      %p130 = por %p128, %p129
      %p132 = scmp.ne.s32.totalorder %s117, %s131
      %p133 = scmp.eq.s32.totalorder %s30, 0
      %p134 = por %p132, %p133
      %s135 = ssub.s32 %s31, %s43
      %s136 = ssub.s32 %s32, %s39
      %s137 = sor.u32 %s135, %s136
      %p138 = scmp.eq.s32.totalorder %s137, 0
      %s140 = sadd.s32 %s139, 1
      %s141 = scalar_select %p138, %s139, %s140
      %p144 = pneg %p138
      %p145 = scmp.eq.s32.totalorder %s24, 1
      %p146 = por %p144, %p145
      %p147 = scmp.ne.s32.totalorder %s139, %s142
      %p148 = scmp.eq.s32.totalorder %s24, 0
      %p149 = por %p147, %p148
      %p150 = scmp.ne.s32.totalorder %s139, %s142
      %p151 = scmp.eq.s32.totalorder %s29, 1
      %p152 = por %p150, %p151
      %p153 = scmp.ne.s32.totalorder %s142, %s143
      %p154 = scmp.eq.s32.totalorder %s29, 0
      %p155 = por %p153, %p154
      %p156 = scmp.ne.s32.totalorder %s142, %s143
      %p157 = scmp.eq.s32.totalorder %s30, 1
      %p158 = por %p156, %p157
      %p160 = scmp.ne.s32.totalorder %s143, %s159
      %p161 = scmp.eq.s32.totalorder %s30, 0
      %p162 = por %p160, %p161
      %s163 = ssub.s32 %s31, %s43
      %s164 = ssub.s32 %s32, %s39
      %s165 = sor.u32 %s163, %s164
      %p166 = scmp.eq.s32.totalorder %s165, 0
      %s168 = sadd.s32 %s167, 1
      %s169 = scalar_select %p166, %s167, %s168
      %p172 = pneg %p166
      %p173 = scmp.eq.s32.totalorder %s24, 1
      %p174 = por %p172, %p173
      %p175 = scmp.ne.s32.totalorder %s167, %s170
      %p176 = scmp.eq.s32.totalorder %s24, 0
      %p177 = por %p175, %p176
      %p178 = scmp.ne.s32.totalorder %s167, %s170
      %p179 = scmp.eq.s32.totalorder %s29, 1
      %p180 = por %p178, %p179
      %p181 = scmp.ne.s32.totalorder %s170, %s171
      %p182 = scmp.eq.s32.totalorder %s29, 0
      %p183 = por %p181, %p182
      %p184 = scmp.ne.s32.totalorder %s170, %s171
      %p185 = scmp.eq.s32.totalorder %s30, 1
      %p186 = por %p184, %p185
      %p188 = scmp.ne.s32.totalorder %s171, %s187
      %p189 = scmp.eq.s32.totalorder %s30, 0
      %p190 = por %p188, %p189
      %s191 = ssub.s32 %s31, %s43
      %s192 = ssub.s32 %s32, %s39
      %s193 = sor.u32 %s191, %s192
      %p194 = scmp.eq.s32.totalorder %s193, 0
      %s196 = sadd.s32 %s195, 1
      %s197 = scalar_select %p194, %s195, %s196
      %p200 = pneg %p194
      %p201 = scmp.eq.s32.totalorder %s24, 1
      %p202 = por %p200, %p201
      %p203 = scmp.ne.s32.totalorder %s195, %s198
      %p204 = scmp.eq.s32.totalorder %s24, 0
      %p205 = por %p203, %p204
      %p206 = scmp.ne.s32.totalorder %s195, %s198
      %p207 = scmp.eq.s32.totalorder %s29, 1
      %p208 = por %p206, %p207
      %p209 = scmp.ne.s32.totalorder %s198, %s199
      %p210 = scmp.eq.s32.totalorder %s29, 0
      %p211 = por %p209, %p210
      %p212 = scmp.ne.s32.totalorder %s198, %s199
      %p213 = scmp.eq.s32.totalorder %s30, 1
      %p214 = por %p212, %p213
      %p216 = scmp.ne.s32.totalorder %s199, %s215
      %p217 = scmp.eq.s32.totalorder %s30, 0
      %p218 = por %p216, %p217
      %p219 = scmp.le.s32.totalorder 1, %s24
      %p220 = scmp.lt.s32.totalorder %s24, 3
      %p221 = pnand %p219, %p220
      %p222 = pneg %p221
      // Predicated region
      $region9: #{tpu_custom_call.1} parent=5 // pred_check
        _
      $region10: #{tpu_custom_call.1} parent=5 // pred_check_branch
        %224 = sbr.rel (%p221) target = $region12
      $region11: #{tpu_custom_call.1} parent=5 // pred_region
        %s225 = ssub.s32 %s24, 1
        // Predicated region
        $region13: #{tpu_custom_call.1} parent=11 // pred_check
          %p226 = pneg %p85
        $region14: #{tpu_custom_call.1} parent=11 // pred_check_branch
          %228 = sbr.rel (%p226) target = $region16
        $region15: #{tpu_custom_call.1} parent=11 // pred_region
          %s230 = ssub.s32 512, 512
          %231 = vsyncadd [#allocation6], %s230
          %s232 = sshll.u32 [#allocation5], 4
          %s233 = int_to_ptr.vmem [resolvable:$true] %s232
          %238 = dma.hbm_to_vmem [thread:$0]  %s1, 512, %s233, [#allocation6], 128, 128, 8
        $region16: #{tpu_custom_call.1} parent=11 // pred_fallthru
          _
        // Predicated region
        $region17: #{tpu_custom_call.1} parent=11 // pred_check
          %p239 = pneg %p106
        $region18: #{tpu_custom_call.1} parent=11 // pred_check_branch
          %241 = sbr.rel (%p239) target = $region20
        $region19: #{tpu_custom_call.1} parent=11 // pred_region
          %s243 = ssub.s32 512, 512
          %244 = vsyncadd [#allocation6], %s243
          %s245 = sshll.u32 [#allocation7], 4
          %s246 = int_to_ptr.vmem [resolvable:$true] %s245
          %251 = dma.hbm_to_vmem [thread:$0]  %s2, 512, %s246, [#allocation6], 128, 128, 8
        $region20: #{tpu_custom_call.1} parent=11 // pred_fallthru
          _
        // Predicated region
        $region21: #{tpu_custom_call.1} parent=11 // pred_check
          %p252 = pneg %p127
        $region22: #{tpu_custom_call.1} parent=11 // pred_check_branch
          %254 = sbr.rel (%p252) target = $region24
        $region23: #{tpu_custom_call.1} parent=11 // pred_region
          %s256 = ssub.s32 512, 512
          %257 = vsyncadd [#allocation9], %s256
          %s258 = sshll.u32 [#allocation8], 4
          %s259 = int_to_ptr.vmem [resolvable:$true] %s258
          %264 = dma.hbm_to_vmem [thread:$0]  %s3, 512, %s259, [#allocation9], 128, 128, 8
        $region24: #{tpu_custom_call.1} parent=11 // pred_fallthru
          _
      $region12: #{tpu_custom_call.1} parent=5 // pred_fallthru
        _
      %p265 = scmp.lt.s32.totalorder %s24, 2
      // Predicated region
      $region25: #{tpu_custom_call.1} parent=5 // pred_check
        %p266 = pneg %p265
      $region26: #{tpu_custom_call.1} parent=5 // pred_check_branch
        %268 = sbr.rel (%p266) target = $region28
      $region27: #{tpu_custom_call.1} parent=5 // pred_region
        // Predicated region
        $region29: #{tpu_custom_call.1} parent=27 // pred_check
          %p269 = pneg %p58
        $region30: #{tpu_custom_call.1} parent=27 // pred_check_branch
          %271 = sbr.rel (%p269) target = $region32
        $region31: #{tpu_custom_call.1} parent=27 // pred_region
          %s272 = sand.u32 %s48, 1
          %s273 = scalar_lea.sflag [#allocation3], %s272
          %s274 = sand.u32 %s48, 1
          %s275 = smul.addr %s274, 8
          %s276 = scalar_lea.vmem [#allocation2], %s275
          %s277 = smul.u32 2, %s32
          %s279 = ssub.s32 128, 128
          %280 = vsyncadd %s273, %s279
          %s281 = smul.addr %s31, 2
          %s282 = sadd.s32 %s277, %s281
          %s283 = smul.addr %s282, 64
          %s284 = scalar_lea.hbm %s0, %s283
          %s285 = sshll.u32 %s276, 4
          %s286 = int_to_ptr.vmem [resolvable:$true] %s285
          %291 = dma.hbm_to_vmem [thread:$0]  %s284, 128, %s286, %s273, 64, 64, 4
        $region32: #{tpu_custom_call.1} parent=27 // pred_fallthru
          _
      $region28: #{tpu_custom_call.1} parent=5 // pred_fallthru
        _
      %p292 = scmp.le.s32.totalorder 1, %s24
      %p293 = scmp.lt.s32.totalorder %s24, 3
      %p294 = pnand %p292, %p293
      %p295 = pneg %p294
      // Predicated region
      $region33: #{tpu_custom_call.1} parent=5 // pred_check
        _
      $region34: #{tpu_custom_call.1} parent=5 // pred_check_branch
        %297 = sbr.rel (%p294) target = $region36
      $region35: #{tpu_custom_call.1} parent=5 // pred_region
        %s298 = ssub.s32 %s24, 1
        %s299 = sand.u32 %s51, 1
        %s300 = scalar_lea.sflag [#allocation3], %s299
        %s301 = sand.u32 %s51, 1
        %s302 = smul.addr %s301, 8
        %s303 = scalar_lea.vmem [#allocation2], %s302
        // Predicated region
        $region37: #{tpu_custom_call.1} parent=35 // pred_check
          %p304 = pneg %p64
        $region38: #{tpu_custom_call.1} parent=35 // pred_check_branch
          %306 = sbr.rel (%p304) target = $region40
        $region39: #{tpu_custom_call.1} parent=35 // pred_region
          %307 = dma.done %s300, 128
        $region40: #{tpu_custom_call.1} parent=35 // pred_fallthru
          _
        // Predicated region
        $region41: #{tpu_custom_call.1} parent=35 // pred_check
          %p308 = pneg %p85
        $region42: #{tpu_custom_call.1} parent=35 // pred_check_branch
          %310 = sbr.rel (%p308) target = $region44
        $region43: #{tpu_custom_call.1} parent=35 // pred_region
          %311 = dma.done [#allocation6], 512
        $region44: #{tpu_custom_call.1} parent=35 // pred_fallthru
          _
        // Predicated region
        $region45: #{tpu_custom_call.1} parent=35 // pred_check
          %p312 = pneg %p106
        $region46: #{tpu_custom_call.1} parent=35 // pred_check_branch
          %314 = sbr.rel (%p312) target = $region48
        $region47: #{tpu_custom_call.1} parent=35 // pred_region
          %315 = dma.done [#allocation6], 512
        $region48: #{tpu_custom_call.1} parent=35 // pred_fallthru
          _
        // Predicated region
        $region49: #{tpu_custom_call.1} parent=35 // pred_check
          %p316 = pneg %p127
        $region50: #{tpu_custom_call.1} parent=35 // pred_check_branch
          %318 = sbr.rel (%p316) target = $region52
        $region51: #{tpu_custom_call.1} parent=35 // pred_region
          %319 = dma.done [#allocation9], 512
        $region52: #{tpu_custom_call.1} parent=35 // pred_fallthru
          _
        %s320 = sand.u32 %s51, 1
        %s321 = scalar_lea.sflag [#allocation3], %s320
        %s322 = sand.u32 %s51, 1
        %s323 = smul.addr %s322, 8
        %s324 = scalar_lea.vmem [#allocation2], %s323
        %p325 = pneg %p64
        %p326 = pneg %p61
        %p327 = pneg %p85
        %p328 = pneg %p82
        %p329 = pneg %p106
        %p330 = pneg %p103
        %p331 = pneg %p127
        %p332 = pneg %p124
        %p333 = pneg %p155
        %p334 = pneg %p152
        %s335 = sand.u32 %s142, 1
        %s336 = scalar_lea.sflag [#allocation4], %s335
        %s337 = sand.u32 %s142, 1
        %s338 = smul.addr %s337, 16
        %s339 = scalar_lea.vmem [#allocation10], %s338
        %p340 = pneg %p183
        %p341 = pneg %p180
        %s342 = sand.u32 %s29, 1
        %s343 = scalar_lea.sflag [#allocation12], %s342
        %s344 = sand.u32 %s170, 1
        %s345 = smul.addr %s344, 16
        %s346 = scalar_lea.vmem [#allocation11], %s345
        %p347 = pneg %p211
        %p348 = pneg %p208
        %s349 = sand.u32 %s29, 1
        %s350 = scalar_lea.sflag [#allocation12], %s349
        %s351 = sand.u32 %s198, 1
        %s352 = smul.addr %s351, 16
        %s353 = scalar_lea.vmem [#allocation13], %s352
        %s354 = smul.u32 2, %s34
        %s355 = smul.u32 2, %s34
        %s356 = smul.u32 2, %s34
        %s357 = smul.u32 2, %s34
        %v359 = vld [vmem:[%s303] sm:$0xf]
        %v360 = vld [vmem:[%s303 + $0x4] sm:$0xf]
        %v361 = vld [vmem:[#allocation5] sm:$0xff]
        %v362 = vld [vmem:[#allocation5 + $0x8] sm:$0xff]
        %v363 = vld [vmem:[#allocation5 + $0x10] sm:$0xff]
        %v364 = vld [vmem:[#allocation5 + $0x18] sm:$0xff]
        %v367 = vunpack.c.l.b16 %v359
        %v368 = vunpack.c.l.b16 %v360
        %v369 = vpack.c.b16 %v368, %v367
        %v374 = vunpack.c.l.b16 %v361
        %v375 = vunpack.c.h.b16 %v361
        %v376 = vunpack.c.l.b16 %v362
        %v377 = vunpack.c.h.b16 %v362
        %v378 = vunpack.c.l.b16 %v363
        %v379 = vunpack.c.h.b16 %v363
        %v380 = vunpack.c.l.b16 %v364
        %v381 = vunpack.c.h.b16 %v364
        %v382 = vpack.c.b16 %v376, %v374
        %v383 = vpack.c.b16 %v377, %v375
        %v384 = vpack.c.b16 %v380, %v378
        %v385 = vpack.c.b16 %v381, %v379
        %vm390 = vcmask 261120
        %v392 = vsel %vm390, %v369, 0
        %394 = vmatprep.subr.bf16.mxu0 %v383
        %395 = vmatpush1.bf16.msra.mxu0 %v382
        %396 = vmatprep.subr.bf16.mxu0 %v385
        %397 = vmatpush1.bf16.msra.mxu0 %v384
        %398 = vmatprep.subr.bf16.mxu0 0
        %399 = vmatpush1.bf16.msra.mxu0 0
        %400 = vmatprep.subr.bf16.mxu0 0
        %401 = vmatpush1.bf16.msra.mxu0 0
        %402 = vmatprep.subr.bf16.mxu0 0
        %403 = vmatpush1.bf16.msra.mxu0 0
        %404 = vmatprep.subr.bf16.mxu0 0
        %405 = vmatpush1.bf16.msra.mxu0 0
        %406 = vmatprep.subr.bf16.mxu0 0
        %407 = vmatpush1.bf16.msra.mxu0 0
        %408 = vmatprep.subr.bf16.mxu0 0
        %409 = vmatpush1.bf16.msra.mxu0 0
        %410 = vmatprep.subr.bf16.mxu0 0
        %411 = vmatpush1.bf16.msra.mxu0 0
        %412 = vmatprep.subr.bf16.mxu0 0
        %413 = vmatpush1.bf16.msra.mxu0 0
        %414 = vmatprep.subr.bf16.mxu0 0
        %415 = vmatpush1.bf16.msra.mxu0 0
        %416 = vmatprep.subr.bf16.mxu0 0
        %417 = vmatpush1.bf16.msra.mxu0 0
        %418 = vmatprep.subr.bf16.mxu0 0
        %419 = vmatpush1.bf16.msra.mxu0 0
        %420 = vmatprep.subr.bf16.mxu0 0
        %421 = vmatpush1.bf16.msra.mxu0 0
        %422 = vmatprep.subr.bf16.mxu0 0
        %423 = vmatpush1.bf16.msra.mxu0 0
        %424 = vmatprep.subr.bf16.mxu0 0
        %425 = vmatpush1.bf16.msra.mxu0 0
        %426 = vmatprep.mubr.bf16.mxu0 0
        %427 = vmatmul.mubr.bf16.gmra.mrb[0].mxu0 %v392
        %v428 = vpop.f32.mrb[0].mxu0
        %v429 = vadd.f32 0.0, %v428
        %v430 = vpop.f32.mrb[0].mxu0
        %v431 = vadd.f32 0.0, %v430
        %v432 = vpop.f32.mrb[0].mxu0
        %v433 = vadd.f32 0.0, %v432
        %v434 = vpop.f32.mrb[0].mxu0
        %v435 = vadd.f32 0.0, %v434
        %436 = vdwg.mxu0
        %v437 = vpack.c.bf16 %v433, %v429
        %v438 = vpack.c.bf16 %v435, %v431
        %v441 = vunpack.c.l.b16 %v437
        %v442 = vunpack.c.l.b16 %v438
        %v443 = vunpack.c.h.b16 %v437
        %v444 = vunpack.c.h.b16 %v438
        %v445 = vpack.c.b16 %v442, %v441
        %v446 = vpack.c.b16 %v444, %v443
        %449 = vst [vmem:[%s339] sm:$0xff] %v445
        %450 = vst [vmem:[%s339 + $0x8] sm:$0xff] %v446
        %v451 = vld [vmem:[#allocation7] sm:$0xff]
        %v452 = vld [vmem:[#allocation7 + $0x8] sm:$0xff]
        %v453 = vld [vmem:[#allocation7 + $0x10] sm:$0xff]
        %v454 = vld [vmem:[#allocation7 + $0x18] sm:$0xff]
        %v459 = vunpack.c.l.b16 %v451
        %v460 = vunpack.c.h.b16 %v451
        %v461 = vunpack.c.l.b16 %v452
        %v462 = vunpack.c.h.b16 %v452
        %v463 = vunpack.c.l.b16 %v453
        %v464 = vunpack.c.h.b16 %v453
        %v465 = vunpack.c.l.b16 %v454
        %v466 = vunpack.c.h.b16 %v454
        %v467 = vpack.c.b16 %v461, %v459
        %v468 = vpack.c.b16 %v462, %v460
        %v469 = vpack.c.b16 %v465, %v463
        %v470 = vpack.c.b16 %v466, %v464
        %475 = vmatprep.subr.bf16.mxu0 %v468
        %476 = vmatpush1.bf16.msra.mxu0 %v467
        %477 = vmatprep.subr.bf16.mxu0 %v470
        %478 = vmatpush1.bf16.msra.mxu0 %v469
        %479 = vmatprep.subr.bf16.mxu0 0
        %480 = vmatpush1.bf16.msra.mxu0 0
        %481 = vmatprep.subr.bf16.mxu0 0
        %482 = vmatpush1.bf16.msra.mxu0 0
        %483 = vmatprep.subr.bf16.mxu0 0
        %484 = vmatpush1.bf16.msra.mxu0 0
        %485 = vmatprep.subr.bf16.mxu0 0
        %486 = vmatpush1.bf16.msra.mxu0 0
        %487 = vmatprep.subr.bf16.mxu0 0
        %488 = vmatpush1.bf16.msra.mxu0 0
        %489 = vmatprep.subr.bf16.mxu0 0
        %490 = vmatpush1.bf16.msra.mxu0 0
        %491 = vmatprep.subr.bf16.mxu0 0
        %492 = vmatpush1.bf16.msra.mxu0 0
        %493 = vmatprep.subr.bf16.mxu0 0
        %494 = vmatpush1.bf16.msra.mxu0 0
        %495 = vmatprep.subr.bf16.mxu0 0
        %496 = vmatpush1.bf16.msra.mxu0 0
        %497 = vmatprep.subr.bf16.mxu0 0
        %498 = vmatpush1.bf16.msra.mxu0 0
        %499 = vmatprep.subr.bf16.mxu0 0
        %500 = vmatpush1.bf16.msra.mxu0 0
        %501 = vmatprep.subr.bf16.mxu0 0
        %502 = vmatpush1.bf16.msra.mxu0 0
        %503 = vmatprep.subr.bf16.mxu0 0
        %504 = vmatpush1.bf16.msra.mxu0 0
        %505 = vmatprep.subr.bf16.mxu0 0
        %506 = vmatpush1.bf16.msra.mxu0 0
        %507 = vmatprep.mubr.bf16.mxu0 0
        %508 = vmatmul.mubr.bf16.gmra.mrb[0].mxu0 %v392
        %v509 = vpop.f32.mrb[0].mxu0
        %v510 = vadd.f32 0.0, %v509
        %v511 = vpop.f32.mrb[0].mxu0
        %v512 = vadd.f32 0.0, %v511
        %v513 = vpop.f32.mrb[0].mxu0
        %v514 = vadd.f32 0.0, %v513
        %v515 = vpop.f32.mrb[0].mxu0
        %v516 = vadd.f32 0.0, %v515
        %517 = vdwg.mxu0
        %v518 = vpack.c.bf16 %v514, %v510
        %v519 = vpack.c.bf16 %v516, %v512
        %v522 = vunpack.c.l.b16 %v518
        %v523 = vunpack.c.l.b16 %v519
        %v524 = vunpack.c.h.b16 %v518
        %v525 = vunpack.c.h.b16 %v519
        %v526 = vpack.c.b16 %v523, %v522
        %v527 = vpack.c.b16 %v525, %v524
        %530 = vst [vmem:[%s346] sm:$0xff] %v526
        %531 = vst [vmem:[%s346 + $0x8] sm:$0xff] %v527
        %v532 = vld [vmem:[#allocation8] sm:$0xff]
        %v533 = vld [vmem:[#allocation8 + $0x8] sm:$0xff]
        %v534 = vld [vmem:[#allocation8 + $0x10] sm:$0xff]
        %v535 = vld [vmem:[#allocation8 + $0x18] sm:$0xff]
        %v540 = vunpack.c.l.b16 %v532
        %v541 = vunpack.c.h.b16 %v532
        %v542 = vunpack.c.l.b16 %v533
        %v543 = vunpack.c.h.b16 %v533
        %v544 = vunpack.c.l.b16 %v534
        %v545 = vunpack.c.h.b16 %v534
        %v546 = vunpack.c.l.b16 %v535
        %v547 = vunpack.c.h.b16 %v535
        %v548 = vpack.c.b16 %v542, %v540
        %v549 = vpack.c.b16 %v543, %v541
        %v550 = vpack.c.b16 %v546, %v544
        %v551 = vpack.c.b16 %v547, %v545
        %556 = vmatprep.subr.bf16.mxu0 %v549
        %557 = vmatpush1.bf16.msra.mxu0 %v548
        %558 = vmatprep.subr.bf16.mxu0 %v551
        %559 = vmatpush1.bf16.msra.mxu0 %v550
        %560 = vmatprep.subr.bf16.mxu0 0
        %561 = vmatpush1.bf16.msra.mxu0 0
        %562 = vmatprep.subr.bf16.mxu0 0
        %563 = vmatpush1.bf16.msra.mxu0 0
        %564 = vmatprep.subr.bf16.mxu0 0
        %565 = vmatpush1.bf16.msra.mxu0 0
        %566 = vmatprep.subr.bf16.mxu0 0
        %567 = vmatpush1.bf16.msra.mxu0 0
        %568 = vmatprep.subr.bf16.mxu0 0
        %569 = vmatpush1.bf16.msra.mxu0 0
        %570 = vmatprep.subr.bf16.mxu0 0
        %571 = vmatpush1.bf16.msra.mxu0 0
        %572 = vmatprep.subr.bf16.mxu0 0
        %573 = vmatpush1.bf16.msra.mxu0 0
        %574 = vmatprep.subr.bf16.mxu0 0
        %575 = vmatpush1.bf16.msra.mxu0 0
        %576 = vmatprep.subr.bf16.mxu0 0
        %577 = vmatpush1.bf16.msra.mxu0 0
        %578 = vmatprep.subr.bf16.mxu0 0
        %579 = vmatpush1.bf16.msra.mxu0 0
        %580 = vmatprep.subr.bf16.mxu0 0
        %581 = vmatpush1.bf16.msra.mxu0 0
        %582 = vmatprep.subr.bf16.mxu0 0
        %583 = vmatpush1.bf16.msra.mxu0 0
        %584 = vmatprep.subr.bf16.mxu0 0
        %585 = vmatpush1.bf16.msra.mxu0 0
        %586 = vmatprep.subr.bf16.mxu0 0
        %587 = vmatpush1.bf16.msra.mxu0 0
        %588 = vmatprep.mubr.bf16.mxu0 0
        %589 = vmatmul.mubr.bf16.gmra.mrb[0].mxu0 %v392
        %v590 = vpop.f32.mrb[0].mxu0
        %v591 = vadd.f32 0.0, %v590
        %v592 = vpop.f32.mrb[0].mxu0
        %v593 = vadd.f32 0.0, %v592
        %v594 = vpop.f32.mrb[0].mxu0
        %v595 = vadd.f32 0.0, %v594
        %v596 = vpop.f32.mrb[0].mxu0
        %v597 = vadd.f32 0.0, %v596
        %598 = vdwg.mxu0
        %v599 = vpack.c.bf16 %v595, %v591
        %v600 = vpack.c.bf16 %v597, %v593
        %v603 = vunpack.c.l.b16 %v599
        %v604 = vunpack.c.l.b16 %v600
        %v605 = vunpack.c.h.b16 %v599
        %v606 = vunpack.c.h.b16 %v600
        %v607 = vpack.c.b16 %v604, %v603
        %v608 = vpack.c.b16 %v606, %v605
        %611 = vst [vmem:[%s353] sm:$0xff] %v607
        %612 = vst [vmem:[%s353 + $0x8] sm:$0xff] %v608
        %s613 = sand.u32 %s142, 1
        %s614 = scalar_lea.sflag [#allocation4], %s613
        %s615 = sand.u32 %s142, 1
        %s616 = smul.addr %s615, 16
        %s617 = scalar_lea.vmem [#allocation10], %s616
        %s618 = sand.u32 %s29, 1
        %s619 = scalar_lea.sflag [#allocation12], %s618
        %s620 = sand.u32 %s170, 1
        %s621 = smul.addr %s620, 16
        %s622 = scalar_lea.vmem [#allocation11], %s621
        %s623 = sand.u32 %s29, 1
        %s624 = scalar_lea.sflag [#allocation12], %s623
        %s625 = sand.u32 %s198, 1
        %s626 = smul.addr %s625, 16
        %s627 = scalar_lea.vmem [#allocation13], %s626
        // Predicated region
        $region53: #{tpu_custom_call.1} parent=35 // pred_check
          %p628 = pneg %p152
        $region54: #{tpu_custom_call.1} parent=35 // pred_check_branch
          %630 = sbr.rel (%p628) target = $region56
        $region55: #{tpu_custom_call.1} parent=35 // pred_region
          %s631 = smul.u32 2, %s34
          %s633 = ssub.s32 256, 256
          %634 = vsyncadd %s614, %s633
          %s635 = smul.addr %s631, 2
          %s636 = smul.addr %s33, 4
          %s637 = sadd.s32 %s635, %s636
          %s638 = smul.addr %s637, 64
          %s639 = scalar_lea.hbm %s4, %s638
          %s640 = sshll.u32 %s617, 4
          %s641 = int_to_ptr.vmem [resolvable:$true] %s640
          %646 = dma.vmem_to_hbm [thread:$0]  %s641, 256, %s639, %s614, 128, 128, 8
        $region56: #{tpu_custom_call.1} parent=35 // pred_fallthru
          _
        // Predicated region
        $region57: #{tpu_custom_call.1} parent=35 // pred_check
          %p647 = pneg %p180
        $region58: #{tpu_custom_call.1} parent=35 // pred_check_branch
          %649 = sbr.rel (%p647) target = $region60
        $region59: #{tpu_custom_call.1} parent=35 // pred_region
          %s650 = smul.u32 2, %s34
          %s652 = ssub.s32 256, 256
          %653 = vsyncadd %s619, %s652
          %s654 = smul.addr %s650, 2
          %s655 = smul.addr %s33, 4
          %s656 = sadd.s32 %s654, %s655
          %s657 = smul.addr %s656, 64
          %s658 = scalar_lea.hbm %s5, %s657
          %s659 = sshll.u32 %s622, 4
          %s660 = int_to_ptr.vmem [resolvable:$true] %s659
          %665 = dma.vmem_to_hbm [thread:$0]  %s660, 256, %s658, %s619, 128, 128, 8
        $region60: #{tpu_custom_call.1} parent=35 // pred_fallthru
          _
        // Predicated region
        $region61: #{tpu_custom_call.1} parent=35 // pred_check
          %p666 = pneg %p208
        $region62: #{tpu_custom_call.1} parent=35 // pred_check_branch
          %668 = sbr.rel (%p666) target = $region64
        $region63: #{tpu_custom_call.1} parent=35 // pred_region
          %s669 = smul.u32 2, %s34
          %s671 = ssub.s32 256, 256
          %672 = vsyncadd %s624, %s671
          %s673 = smul.addr %s669, 2
          %s674 = smul.addr %s33, 4
          %s675 = sadd.s32 %s673, %s674
          %s676 = smul.addr %s675, 64
          %s677 = scalar_lea.hbm %s6, %s676
          %s678 = sshll.u32 %s627, 4
          %s679 = int_to_ptr.vmem [resolvable:$true] %s678
          %684 = dma.vmem_to_hbm [thread:$0]  %s679, 256, %s677, %s624, 128, 128, 8
        $region64: #{tpu_custom_call.1} parent=35 // pred_fallthru
          _
      $region36: #{tpu_custom_call.1} parent=5 // pred_fallthru
        _
      %p685 = scmp.le.s32.totalorder 2, %s24
      // Predicated region
      $region65: #{tpu_custom_call.1} parent=5 // pred_check
        %p686 = pneg %p685
      $region66: #{tpu_custom_call.1} parent=5 // pred_check_branch
        %688 = sbr.rel (%p686) target = $region68
      $region67: #{tpu_custom_call.1} parent=5 // pred_region
        %s689 = ssub.s32 %s24, 2
        // Predicated region
        $region69: #{tpu_custom_call.1} parent=67 // pred_check
          %p690 = pneg %p158
        $region70: #{tpu_custom_call.1} parent=67 // pred_check_branch
          %692 = sbr.rel (%p690) target = $region72
        $region71: #{tpu_custom_call.1} parent=67 // pred_region
          %s693 = sand.u32 %s143, 1
          %s694 = scalar_lea.sflag [#allocation4], %s693
          %s695 = sand.u32 %s143, 1
          %s696 = smul.addr %s695, 16
          %s697 = scalar_lea.vmem [#allocation10], %s696
          %698 = dma.done %s694, 256
        $region72: #{tpu_custom_call.1} parent=67 // pred_fallthru
          _
        // Predicated region
        $region73: #{tpu_custom_call.1} parent=67 // pred_check
          %p699 = pneg %p186
        $region74: #{tpu_custom_call.1} parent=67 // pred_check_branch
          %701 = sbr.rel (%p699) target = $region76
        $region75: #{tpu_custom_call.1} parent=67 // pred_region
          %s702 = sand.u32 %s30, 1
          %s703 = scalar_lea.sflag [#allocation12], %s702
          %s704 = sand.u32 %s171, 1
          %s705 = smul.addr %s704, 16
          %s706 = scalar_lea.vmem [#allocation11], %s705
          %707 = dma.done %s703, 256
        $region76: #{tpu_custom_call.1} parent=67 // pred_fallthru
          _
        // Predicated region
        $region77: #{tpu_custom_call.1} parent=67 // pred_check
          %p708 = pneg %p214
        $region78: #{tpu_custom_call.1} parent=67 // pred_check_branch
          %710 = sbr.rel (%p708) target = $region80
        $region79: #{tpu_custom_call.1} parent=67 // pred_region
          %s711 = sand.u32 %s30, 1
          %s712 = scalar_lea.sflag [#allocation12], %s711
          %s713 = sand.u32 %s199, 1
          %s714 = smul.addr %s713, 16
          %s715 = scalar_lea.vmem [#allocation13], %s714
          %716 = dma.done %s712, 256
        $region80: #{tpu_custom_call.1} parent=67 // pred_fallthru
          _
      $region68: #{tpu_custom_call.1} parent=5 // pred_fallthru
        _
    $region6: #{tpu_custom_call.1} parent=1 // loop_footer
      %s28 = sadd.s32 1, %s24
    $region7: #{tpu_custom_call.1} parent=1 // loop_footer_branch
      %23 = sbr.rel target = $region3
    $region8: #{tpu_custom_call.1} parent=1 // loop_exit
      _
    %717 = vsyncpa [#allocation3], 1
    %s718 = scalar_lea.sflag [#allocation3], 1
    %719 = vsyncpa %s718, 1
    %720 = vsyncpa [#allocation6], 1
    %721 = vsyncpa [#allocation9], 1
    %722 = vsyncpa [#allocation4], 1
    %s723 = scalar_lea.sflag [#allocation4], 1
    %724 = vsyncpa %s723, 1
    %725 = vsyncpa [#allocation12], 1
    %s726 = scalar_lea.sflag [#allocation12], 1
    %727 = vsyncpa %s726, 1

</llo_original>
